<compile_context>
chip_gen: v5e
topology: v5e:2x2
jax: 0.10.0
libtpu: 0.0.40
codegen_flags: <defaults>
</compile_context>

<pallas_src>
import functools

import jax
import jax.numpy as jnp
from jax import lax
from jax.experimental import pallas as pl
from jax.experimental.pallas import tpu as pltpu


def _dw_reparam_kernel(x_ref, w_ref, b_ref, o_ref, xp_ref, *, pad, k_taps, l_chunk):
    """One batch element x one channel block of the re-parameterized depthwise conv.

    x_ref : (1, C_blk, L)       input block, channels on sublanes, L on lanes
    w_ref : (C_blk, K)          equivalent depthwise kernel (BN + small branch folded)
    b_ref : (C_blk, 1)          equivalent bias
    o_ref : (1, C_blk, L)       output block (same layout as input)
    xp_ref: (C_blk, L + 2*pad)  VMEM staging buffer with zero halos
    """
    c_blk = x_ref.shape[1]
    l = x_ref.shape[2]

    # Stage the input behind a zero halo so every tap below is a plain static
    # lane-offset load (no per-tap edge masking).  Zeroing the whole staging
    # buffer each step is cheap (< one tap of work) and core-count agnostic.
    xp_ref[...] = jnp.zeros_like(xp_ref)
    xp_ref[:, pl.ds(pad, l)] = x_ref[0]

    w = w_ref[...]        # (C_blk, K) -- tiny, lives in vregs
    b = b_ref[...]        # (C_blk, 1)

    # Tile L so the accumulator + per-tap operands stay inside the vreg file.
    for l0 in range(0, l, l_chunk):
        lc = min(l_chunk, l - l0)
        # Bias-initialised accumulator: one lane-broadcast per chunk.
        acc = jnp.broadcast_to(b, (c_blk, lc))
        # Fully unrolled static tap loop: each tap = one lane-offset VMEM load,
        # one lane-broadcast of the weight column, one FMA.
        for k in range(k_taps):
            acc = acc + xp_ref[:, pl.ds(l0 + k, lc)] * w[:, k:k + 1]
        o_ref[0, :, pl.ds(l0, lc)] = acc.astype(o_ref.dtype)


def _pick_c_block(channels, batch):
    """Largest sublane-friendly channel block that still gives >=8 grid steps."""
    divisors = [cb for cb in (128, 64, 32, 16, 8) if cb <= channels and channels % cb == 0]
    if not divisors:
        return channels  # block == full dim is always legal
    for cb in divisors:
        if batch * (channels // cb) >= 8:
            return cb
    return divisors[-1]


def reparam_large_kernel_conv(x_ncl, params, *, kernel_size, small_kernel, stride=1):
    """ReparamLargeKernelConv forward via Pallas.  x_ncl: (B, C, L) PyTorch layout."""
    B, C, L = x_ncl.shape
    assert stride == 1, "ModernTCN Block uses the depthwise conv with stride=1"
    assert kernel_size % 2 == 1 and small_kernel % 2 == 1, (
        "odd kernel sizes required so both branches share the output length")
    assert small_kernel <= kernel_size
    pad = kernel_size // 2

    # --- structural re-parameterization (same algebra as merge_kernel()) ------
    def fuse(w_dw, bn):
        scale = (bn["gamma"] / jnp.sqrt(bn["var"] + bn["eps"])).astype(jnp.float32)
        shift = (bn["beta"] - bn["mean"] * scale).astype(jnp.float32)
        return w_dw[:, 0, :].astype(jnp.float32) * scale[:, None], shift   # (C,K),(C,)

    w_l, b_l = fuse(params["w_large"], params["bn_large"])
    w_s, b_s = fuse(params["w_small"], params["bn_small"])
    off = (kernel_size - small_kernel) // 2
    w_eq = w_l + jnp.pad(w_s, ((0, 0), (off, off)))        # (C, K)
    b_eq = (b_l + b_s).reshape(C, 1)                        # (C, 1)

    c_blk = _pick_c_block(C, B)
    grid = (B, C // c_blk)
    l_chunk = 512  # lanes per inner tile: bounds accumulator/operand live ranges

    kern = functools.partial(_dw_reparam_kernel, pad=pad, k_taps=kernel_size,
                             l_chunk=l_chunk)

    out = pl.pallas_call(
        kern,
        out_shape=jax.ShapeDtypeStruct((B, C, L), jnp.float32),
        grid_spec=pltpu.PrefetchScalarGridSpec(
            num_scalar_prefetch=0,
            grid=grid,
            in_specs=[
                pl.BlockSpec((1, c_blk, L), lambda b, c: (b, c, 0)),
                pl.BlockSpec((c_blk, kernel_size), lambda b, c: (c, 0)),
                pl.BlockSpec((c_blk, 1), lambda b, c: (c, 0)),
            ],
            out_specs=pl.BlockSpec((1, c_blk, L), lambda b, c: (b, c, 0)),
            scratch_shapes=[pltpu.VMEM((c_blk, L + 2 * pad), jnp.float32)],
        ),
        compiler_params=pltpu.CompilerParams(
            dimension_semantics=("parallel", "parallel")),
    )(x_ncl.astype(jnp.float32), w_eq, b_eq)

    return out


def _reference_forward(x_ncl, params, *, kernel_size, small_kernel, stride=1):
    """Pure-JAX reference (two-branch, un-merged) matching the PyTorch eval forward."""
    C = x_ncl.shape[1]

    def conv_bn(x, w, bn, pad):
        y = lax.conv_general_dilated(
            x.astype(jnp.float32), w.astype(jnp.float32),
            window_strides=(stride,), padding=[(pad, pad)],
            dimension_numbers=("NCH", "OIH", "NCH"),
            feature_group_count=C)
        scale = bn["gamma"] / jnp.sqrt(bn["var"] + bn["eps"])
        shift = bn["beta"] - bn["mean"] * scale
        return y * scale[None, :, None] + shift[None, :, None]

    out = conv_bn(x_ncl, params["w_large"], params["bn_large"], kernel_size // 2)
    out = out + conv_bn(x_ncl, params["w_small"], params["bn_small"], small_kernel // 2)
    return out


def _make_params(key, channels, kernel_size, small_kernel):
    ks = jax.random.split(key, 10)

    def bn(k1, k2, k3, k4):
        return dict(
            gamma=jax.random.uniform(k1, (channels,), jnp.float32, 0.5, 1.5),
            beta=jax.random.normal(k2, (channels,), jnp.float32) * 0.1,
            mean=jax.random.normal(k3, (channels,), jnp.float32) * 0.1,
            var=jax.random.uniform(k4, (channels,), jnp.float32, 0.5, 1.5),
            eps=1e-5,
        )

    return dict(
        # Depthwise Conv1d weights: (out_channels, in_channels/groups=1, K)
        w_large=jax.random.normal(ks[0], (channels, 1, kernel_size), jnp.float32) * 0.2,
        w_small=jax.random.normal(ks[1], (channels, 1, small_kernel), jnp.float32) * 0.2,
        bn_large=bn(ks[2], ks[3], ks[4], ks[5]),
        bn_small=bn(ks[6], ks[7], ks[8], ks[9]),
    )


if __name__ == "__main__":
    # Small shapes consistent with ModernTCN's depthwise usage (groups == channels).
    B, C, L = 2, 24, 128
    KERNEL_SIZE, SMALL_KERNEL, STRIDE = 13, 5, 1

    key = jax.random.PRNGKey(0)
    k_x, k_p = jax.random.split(key)
    x = jax.random.normal(k_x, (B, C, L), jnp.float32)
    params = _make_params(k_p, C, KERNEL_SIZE, SMALL_KERNEL)

    out = reparam_large_kernel_conv(
        x, params, kernel_size=KERNEL_SIZE, small_kernel=SMALL_KERNEL, stride=STRIDE)
    out = jax.block_until_ready(out)

    ref = _reference_forward(
        x, params, kernel_size=KERNEL_SIZE, small_kernel=SMALL_KERNEL, stride=STRIDE)
    assert out.shape == ref.shape, (out.shape, ref.shape)
    max_err = float(jnp.abs(out - ref).max())
    # Re-parameterization reassociates the BN scale; allow small f32 drift.
    assert jnp.allclose(out, ref, rtol=1e-3, atol=1e-3), max_err

    print("KERNEL_OK")
</pallas_src>

<mosaic_0001>
module attributes {stable_mosaic.version = 11 : i64} {
  func.func @_dw_reparam_kernel(%arg0: i32, %arg1: i32, %arg2: memref<1x8x128xf32, #tpu.memory_space<vmem>>, %arg3: memref<8x13xf32, #tpu.memory_space<vmem>>, %arg4: memref<8x1xf32, #tpu.memory_space<vmem>>, %arg5: memref<1x8x128xf32, #tpu.memory_space<vmem>>, %arg6: memref<8x140xf32, #tpu.memory_space<vmem>>) attributes {dimension_semantics = [#tpu.dimension_semantics<parallel>, #tpu.dimension_semantics<parallel>], iteration_bounds = array<i64: 2, 3>, scalar_prefetch = 0 : i64, scratch_operands = 1 : i64, tpu.core_type = #tpu.core_type<tc>, window_params = [{transform_indices = @transform_0, window_bounds = array<i64: 1, 8, 128>}, {transform_indices = @transform_1, window_bounds = array<i64: 8, 13>}, {transform_indices = @transform_2, window_bounds = array<i64: 8, 1>}, {transform_indices = @transform_3, window_bounds = array<i64: 1, 8, 128>}]} {
    %cst = arith.constant 0.000000e+00 : f32
    %0 = vector.broadcast %cst : f32 to vector<8x140xf32>
    %c0 = arith.constant 0 : index
    %c0_0 = arith.constant 0 : index
    %1 = vector.load %arg6[%c0, %c0_0] : memref<8x140xf32, #tpu.memory_space<vmem>>, vector<8x140xf32>
    tpu.vector_store %arg6[%c0, %c0_0], %0 {strides = array<i32>} : memref<8x140xf32, #tpu.memory_space<vmem>>, vector<8x140xf32>,
    %c0_1 = arith.constant 0 : index
    %c0_2 = arith.constant 0 : index
    %c0_3 = arith.constant 0 : index
    %2 = vector.load %arg2[%c0_1, %c0_2, %c0_3] : memref<1x8x128xf32, #tpu.memory_space<vmem>>, vector<1x8x128xf32>
    %3 = vector.shape_cast %2 : vector<1x8x128xf32> to vector<8x128xf32>
    %c0_4 = arith.constant 0 : index
    %c6 = arith.constant 6 : index
    %4 = vector.load %arg6[%c0_4, %c6] : memref<8x140xf32, #tpu.memory_space<vmem>>, vector<8x128xf32>
    tpu.vector_store %arg6[%c0_4, %c6], %3 {strides = array<i32>} : memref<8x140xf32, #tpu.memory_space<vmem>>, vector<8x128xf32>,
    %c0_5 = arith.constant 0 : index
    %c0_6 = arith.constant 0 : index
    %5 = vector.load %arg3[%c0_5, %c0_6] : memref<8x13xf32, #tpu.memory_space<vmem>>, vector<8x13xf32>
    %c0_7 = arith.constant 0 : index
    %c0_8 = arith.constant 0 : index
    %6 = vector.load %arg4[%c0_7, %c0_8] : memref<8x1xf32, #tpu.memory_space<vmem>>, vector<8x1xf32>
    %7 = vector.shape_cast %6 : vector<8x1xf32> to vector<8x1xf32>
    %8 = vector.broadcast %7 : vector<8x1xf32> to vector<8x128xf32>
    %c0_9 = arith.constant 0 : index
    %c0_10 = arith.constant 0 : index
    %9 = vector.load %arg6[%c0_9, %c0_10] : memref<8x140xf32, #tpu.memory_space<vmem>>, vector<8x128xf32>
    %10 = vector.extract_strided_slice %5 {offsets = [0, 0], sizes = [8, 1], strides = [1, 1]} : vector<8x13xf32> to vector<8x1xf32>
    %11 = vector.broadcast %10 : vector<8x1xf32> to vector<8x128xf32>
    %12 = arith.mulf %9, %11 : vector<8x128xf32>
    %13 = arith.addf %8, %12 : vector<8x128xf32>
    %c0_11 = arith.constant 0 : index
    %c1 = arith.constant 1 : index
    %14 = vector.load %arg6[%c0_11, %c1] : memref<8x140xf32, #tpu.memory_space<vmem>>, vector<8x128xf32>
    %15 = vector.extract_strided_slice %5 {offsets = [0, 1], sizes = [8, 1], strides = [1, 1]} : vector<8x13xf32> to vector<8x1xf32>
    %16 = vector.broadcast %15 : vector<8x1xf32> to vector<8x128xf32>
    %17 = arith.mulf %14, %16 : vector<8x128xf32>
    %18 = arith.addf %13, %17 : vector<8x128xf32>
    %c0_12 = arith.constant 0 : index
    %c2 = arith.constant 2 : index
    %19 = vector.load %arg6[%c0_12, %c2] : memref<8x140xf32, #tpu.memory_space<vmem>>, vector<8x128xf32>
    %20 = vector.extract_strided_slice %5 {offsets = [0, 2], sizes = [8, 1], strides = [1, 1]} : vector<8x13xf32> to vector<8x1xf32>
    %21 = vector.broadcast %20 : vector<8x1xf32> to vector<8x128xf32>
    %22 = arith.mulf %19, %21 : vector<8x128xf32>
    %23 = arith.addf %18, %22 : vector<8x128xf32>
    %c0_13 = arith.constant 0 : index
    %c3 = arith.constant 3 : index
    %24 = vector.load %arg6[%c0_13, %c3] : memref<8x140xf32, #tpu.memory_space<vmem>>, vector<8x128xf32>
    %25 = vector.extract_strided_slice %5 {offsets = [0, 3], sizes = [8, 1], strides = [1, 1]} : vector<8x13xf32> to vector<8x1xf32>
    %26 = vector.broadcast %25 : vector<8x1xf32> to vector<8x128xf32>
    %27 = arith.mulf %24, %26 : vector<8x128xf32>
    %28 = arith.addf %23, %27 : vector<8x128xf32>
    %c0_14 = arith.constant 0 : index
    %c4 = arith.constant 4 : index
    %29 = vector.load %arg6[%c0_14, %c4] : memref<8x140xf32, #tpu.memory_space<vmem>>, vector<8x128xf32>
    %30 = vector.extract_strided_slice %5 {offsets = [0, 4], sizes = [8, 1], strides = [1, 1]} : vector<8x13xf32> to vector<8x1xf32>
    %31 = vector.broadcast %30 : vector<8x1xf32> to vector<8x128xf32>
    %32 = arith.mulf %29, %31 : vector<8x128xf32>
    %33 = arith.addf %28, %32 : vector<8x128xf32>
    %c0_15 = arith.constant 0 : index
    %c5 = arith.constant 5 : index
    %34 = vector.load %arg6[%c0_15, %c5] : memref<8x140xf32, #tpu.memory_space<vmem>>, vector<8x128xf32>
    %35 = vector.extract_strided_slice %5 {offsets = [0, 5], sizes = [8, 1], strides = [1, 1]} : vector<8x13xf32> to vector<8x1xf32>
    %36 = vector.broadcast %35 : vector<8x1xf32> to vector<8x128xf32>
    %37 = arith.mulf %34, %36 : vector<8x128xf32>
    %38 = arith.addf %33, %37 : vector<8x128xf32>
    %c0_16 = arith.constant 0 : index
    %c6_17 = arith.constant 6 : index
    %39 = vector.load %arg6[%c0_16, %c6_17] : memref<8x140xf32, #tpu.memory_space<vmem>>, vector<8x128xf32>
    %40 = vector.extract_strided_slice %5 {offsets = [0, 6], sizes = [8, 1], strides = [1, 1]} : vector<8x13xf32> to vector<8x1xf32>
    %41 = vector.broadcast %40 : vector<8x1xf32> to vector<8x128xf32>
    %42 = arith.mulf %39, %41 : vector<8x128xf32>
    %43 = arith.addf %38, %42 : vector<8x128xf32>
    %c0_18 = arith.constant 0 : index
    %c7 = arith.constant 7 : index
    %44 = vector.load %arg6[%c0_18, %c7] : memref<8x140xf32, #tpu.memory_space<vmem>>, vector<8x128xf32>
    %45 = vector.extract_strided_slice %5 {offsets = [0, 7], sizes = [8, 1], strides = [1, 1]} : vector<8x13xf32> to vector<8x1xf32>
    %46 = vector.broadcast %45 : vector<8x1xf32> to vector<8x128xf32>
    %47 = arith.mulf %44, %46 : vector<8x128xf32>
    %48 = arith.addf %43, %47 : vector<8x128xf32>
    %c0_19 = arith.constant 0 : index
    %c8 = arith.constant 8 : index
    %49 = vector.load %arg6[%c0_19, %c8] : memref<8x140xf32, #tpu.memory_space<vmem>>, vector<8x128xf32>
    %50 = vector.extract_strided_slice %5 {offsets = [0, 8], sizes = [8, 1], strides = [1, 1]} : vector<8x13xf32> to vector<8x1xf32>
    %51 = vector.broadcast %50 : vector<8x1xf32> to vector<8x128xf32>
    %52 = arith.mulf %49, %51 : vector<8x128xf32>
    %53 = arith.addf %48, %52 : vector<8x128xf32>
    %c0_20 = arith.constant 0 : index
    %c9 = arith.constant 9 : index
    %54 = vector.load %arg6[%c0_20, %c9] : memref<8x140xf32, #tpu.memory_space<vmem>>, vector<8x128xf32>
    %55 = vector.extract_strided_slice %5 {offsets = [0, 9], sizes = [8, 1], strides = [1, 1]} : vector<8x13xf32> to vector<8x1xf32>
    %56 = vector.broadcast %55 : vector<8x1xf32> to vector<8x128xf32>
    %57 = arith.mulf %54, %56 : vector<8x128xf32>
    %58 = arith.addf %53, %57 : vector<8x128xf32>
    %c0_21 = arith.constant 0 : index
    %c10 = arith.constant 10 : index
    %59 = vector.load %arg6[%c0_21, %c10] : memref<8x140xf32, #tpu.memory_space<vmem>>, vector<8x128xf32>
    %60 = vector.extract_strided_slice %5 {offsets = [0, 10], sizes = [8, 1], strides = [1, 1]} : vector<8x13xf32> to vector<8x1xf32>
    %61 = vector.broadcast %60 : vector<8x1xf32> to vector<8x128xf32>
    %62 = arith.mulf %59, %61 : vector<8x128xf32>
    %63 = arith.addf %58, %62 : vector<8x128xf32>
    %c0_22 = arith.constant 0 : index
    %c11 = arith.constant 11 : index
    %64 = vector.load %arg6[%c0_22, %c11] : memref<8x140xf32, #tpu.memory_space<vmem>>, vector<8x128xf32>
    %65 = vector.extract_strided_slice %5 {offsets = [0, 11], sizes = [8, 1], strides = [1, 1]} : vector<8x13xf32> to vector<8x1xf32>
    %66 = vector.broadcast %65 : vector<8x1xf32> to vector<8x128xf32>
    %67 = arith.mulf %64, %66 : vector<8x128xf32>
    %68 = arith.addf %63, %67 : vector<8x128xf32>
    %c0_23 = arith.constant 0 : index
    %c12 = arith.constant 12 : index
    %69 = vector.load %arg6[%c0_23, %c12] : memref<8x140xf32, #tpu.memory_space<vmem>>, vector<8x128xf32>
    %70 = vector.extract_strided_slice %5 {offsets = [0, 12], sizes = [8, 1], strides = [1, 1]} : vector<8x13xf32> to vector<8x1xf32>
    %71 = vector.broadcast %70 : vector<8x1xf32> to vector<8x128xf32>
    %72 = arith.mulf %69, %71 : vector<8x128xf32>
    %73 = arith.addf %68, %72 : vector<8x128xf32>
    %c0_24 = arith.constant 0 : index
    %c0_25 = arith.constant 0 : index
    %c0_26 = arith.constant 0 : index
    %74 = vector.load %arg5[%c0_24, %c0_25, %c0_26] : memref<1x8x128xf32, #tpu.memory_space<vmem>>, vector<1x8x128xf32>
    %75 = vector.shape_cast %74 : vector<1x8x128xf32> to vector<8x128xf32>
    %76 = vector.shape_cast %73 : vector<8x128xf32> to vector<1x8x128xf32>
    tpu.vector_store %arg5[%c0_24, %c0_25, %c0_26], %76 {strides = array<i32>} : memref<1x8x128xf32, #tpu.memory_space<vmem>>, vector<1x8x128xf32>,
    return
  }
  func.func @transform_0(%arg0: i32, %arg1: i32) -> (i32, i32, i32) {
    %c0_i32 = arith.constant 0 : i32
    %c0_i32_0 = arith.constant 0 : i32
    return %arg0, %arg1, %c0_i32 : i32, i32, i32
  }
  func.func @transform_1(%arg0: i32, %arg1: i32) -> (i32, i32) {
    %c0_i32 = arith.constant 0 : i32
    %c0_i32_0 = arith.constant 0 : i32
    return %arg1, %c0_i32 : i32, i32
  }
  func.func @transform_2(%arg0: i32, %arg1: i32) -> (i32, i32) {
    %c0_i32 = arith.constant 0 : i32
    %c0_i32_0 = arith.constant 0 : i32
    return %arg1, %c0_i32 : i32, i32
  }
  func.func @transform_3(%arg0: i32, %arg1: i32) -> (i32, i32, i32) {
    %c0_i32 = arith.constant 0 : i32
    %c0_i32_0 = arith.constant 0 : i32
    return %arg0, %arg1, %c0_i32 : i32, i32, i32
  }
}

</mosaic_0001>

<llo_original>
// kernel: tpu_custom_call.1
$region0: #{tpu_custom_call.1}
  #allocation0 [shape = 'u32[]', space=smem, size = 0x4, offset = 0x4, fixed_abs, tag = 'smem constant byte address 0x4 - core index']
  #allocation1 [shape = 'u32[72,128]{1,0:T(1,128)}', space=vmem, size = 0x9000, scoped, tag = 'internal scratch']
  #allocation2 [shape = 'f32[8,140]{1,0:T(8,128)}', space=vmem, size = 0x2000, scoped, tag = 'scratch operand']
  %s0 = inlined_call_operand.vmem [shape: f32[2,24,128], index: 0, kind: input, shape index: {}]
  %s1 = inlined_call_operand.vmem [shape: f32[24,13], index: 1, kind: input, shape index: {}]
  %s2 = inlined_call_operand.vmem [shape: f32[24,1], index: 2, kind: input, shape index: {}]
  %s3 = inlined_call_operand.hbm [shape: f32[2,24,128], index: 3, kind: output, shape index: {}]
  %s4 = sld [smem:[#allocation0]]
  $region45: #{tpu_custom_call.1} parent=0
    _
  %s6 = ssub.s32 1, %s4
  %s7 = scalar_select 0, %s6, %s4
  $region1: #{tpu_custom_call.1} parent=0
    #allocation3 [shape = 'u8[8192]{0}', space=vmem, size = 0x2000, scoped, tag = 'output window, operand 0']
    #allocation4 [shape = 's32[2]{0}', space=sflag, size = 0x8, scoped, tag = 'scoped memory for tpu_custom_call.1']
    %8 = vsyncpa [#allocation4], 0
    %s9 = scalar_lea.sflag [#allocation4], 1
    %10 = vsyncpa %s9, 0
    loop: start=0, step=1, limit=8
    $region2: #{tpu_custom_call.1} parent=1 // loop_pre_header
      _
    $region3: #{tpu_custom_call.1} parent=1 // loop_header
      %s12 = sphi 0, %s16
      %p13 = scmp.ge.s32.totalorder %s12, 8
      %s19 = sphi 0, %s31
      %s20 = sphi 0, %s27
      %s21 = sphi 0, %s19
      %s22 = sphi 0, %s20
      %s23 = sphi 0, %s21
      %s24 = sphi 0, %s22
      %s36 = sphi 0, %s38
      %s39 = sphi 0, %s36
      %s40 = sphi 0, %s39
      %s56 = sphi 0, %s40
      %s62 = sphi 0, %s64
      %s65 = sphi 0, %s62
      %s66 = sphi 0, %s65
      %s82 = sphi 0, %s66
      %s88 = sphi 0, %s90
      %s91 = sphi 0, %s88
      %s92 = sphi 0, %s91
      %s108 = sphi 0, %s92
      %s116 = sphi 0, %s118
      %s119 = sphi 0, %s116
      %s120 = sphi 0, %s119
      %s136 = sphi 0, %s120
    $region4: #{tpu_custom_call.1} parent=1 // loop_header_branch
      %15 = sbr.rel (%p13) target = $region8
    $region5: #{tpu_custom_call.1} parent=1 // loop_body
      %s17 = ssub.s32 %s12, 1
      %s18 = ssub.s32 %s12, 2
      %s25 = sadd.s32 1, %s20
      %p26 = scmp.ge.s32.totalorder %s25, 3
      %s27 = scalar_select %p26, 0, %s25
      %s28 = sadd.s32 1, %s19
      %s29 = scalar_select %p26, %s28, %s19
      %p30 = scmp.ge.s32.totalorder %s29, 2
      %s31 = scalar_select %p30, 0, %s29
      %s32 = ssub.s32 %s19, %s31
      %s33 = ssub.s32 %s20, %s27
      %s34 = sor.u32 %s32, %s33
      %p35 = scmp.eq.s32.totalorder %s34, 0
      %s37 = sadd.s32 %s36, 1
      %s38 = scalar_select %p35, %s36, %s37
      %p41 = pneg %p35
      %p42 = scmp.eq.s32.totalorder %s12, 5
      %p43 = por %p41, %p42
      %p44 = scmp.ne.s32.totalorder %s36, %s39
      %p45 = scmp.eq.s32.totalorder %s12, 0
      %p46 = por %p44, %p45
      %p47 = scmp.ne.s32.totalorder %s36, %s39
      %p48 = scmp.eq.s32.totalorder %s17, 5
      %p49 = por %p47, %p48
      %p50 = scmp.ne.s32.totalorder %s39, %s40
      %p51 = scmp.eq.s32.totalorder %s17, 0
      %p52 = por %p50, %p51
      %p53 = scmp.ne.s32.totalorder %s39, %s40
      %p54 = scmp.eq.s32.totalorder %s18, 5
      %p55 = por %p53, %p54
      %p57 = scmp.ne.s32.totalorder %s40, %s56
      %p58 = scmp.eq.s32.totalorder %s18, 0
      %p59 = por %p57, %p58
      %s60 = ssub.s32 %s20, %s27
      %p61 = scmp.eq.s32.totalorder %s60, 0
      %s63 = sadd.s32 %s62, 1
      %s64 = scalar_select %p61, %s62, %s63
      %p67 = pneg %p61
      %p68 = scmp.eq.s32.totalorder %s12, 5
      %p69 = por %p67, %p68
      %p70 = scmp.ne.s32.totalorder %s62, %s65
      %p71 = scmp.eq.s32.totalorder %s12, 0
      %p72 = por %p70, %p71
      %p73 = scmp.ne.s32.totalorder %s62, %s65
      %p74 = scmp.eq.s32.totalorder %s17, 5
      %p75 = por %p73, %p74
      %p76 = scmp.ne.s32.totalorder %s65, %s66
      %p77 = scmp.eq.s32.totalorder %s17, 0
      %p78 = por %p76, %p77
      %p79 = scmp.ne.s32.totalorder %s65, %s66
      %p80 = scmp.eq.s32.totalorder %s18, 5
      %p81 = por %p79, %p80
      %p83 = scmp.ne.s32.totalorder %s66, %s82
      %p84 = scmp.eq.s32.totalorder %s18, 0
      %p85 = por %p83, %p84
      %s86 = ssub.s32 %s20, %s27
      %p87 = scmp.eq.s32.totalorder %s86, 0
      %s89 = sadd.s32 %s88, 1
      %s90 = scalar_select %p87, %s88, %s89
      %p93 = pneg %p87
      %p94 = scmp.eq.s32.totalorder %s12, 5
      %p95 = por %p93, %p94
      %p96 = scmp.ne.s32.totalorder %s88, %s91
      %p97 = scmp.eq.s32.totalorder %s12, 0
      %p98 = por %p96, %p97
      %p99 = scmp.ne.s32.totalorder %s88, %s91
      %p100 = scmp.eq.s32.totalorder %s17, 5
      %p101 = por %p99, %p100
      %p102 = scmp.ne.s32.totalorder %s91, %s92
      %p103 = scmp.eq.s32.totalorder %s17, 0
      %p104 = por %p102, %p103
      %p105 = scmp.ne.s32.totalorder %s91, %s92
      %p106 = scmp.eq.s32.totalorder %s18, 5
      %p107 = por %p105, %p106
      %p109 = scmp.ne.s32.totalorder %s92, %s108
      %p110 = scmp.eq.s32.totalorder %s18, 0
      %p111 = por %p109, %p110
      %s112 = ssub.s32 %s19, %s31
      %s113 = ssub.s32 %s20, %s27
      %s114 = sor.u32 %s112, %s113
      %p115 = scmp.eq.s32.totalorder %s114, 0
      %s117 = sadd.s32 %s116, 1
      %s118 = scalar_select %p115, %s116, %s117
      %p121 = pneg %p115
      %p122 = scmp.eq.s32.totalorder %s12, 5
      %p123 = por %p121, %p122
      %p124 = scmp.ne.s32.totalorder %s116, %s119
      %p125 = scmp.eq.s32.totalorder %s12, 0
      %p126 = por %p124, %p125
      %p127 = scmp.ne.s32.totalorder %s116, %s119
      %p128 = scmp.eq.s32.totalorder %s17, 5
      %p129 = por %p127, %p128
      %p130 = scmp.ne.s32.totalorder %s119, %s120
      %p131 = scmp.eq.s32.totalorder %s17, 0
      %p132 = por %p130, %p131
      %p133 = scmp.ne.s32.totalorder %s119, %s120
      %p134 = scmp.eq.s32.totalorder %s18, 5
      %p135 = por %p133, %p134
      %p137 = scmp.ne.s32.totalorder %s120, %s136
      %p138 = scmp.eq.s32.totalorder %s18, 0
      %p139 = por %p137, %p138
      %p140 = scmp.le.s32.totalorder 1, %s12
      %p141 = scmp.lt.s32.totalorder %s12, 7
      %p142 = pnand %p140, %p141
      %p143 = pneg %p142
      // Predicated region
      $region9: #{tpu_custom_call.1} parent=5 // pred_check
        _
      $region10: #{tpu_custom_call.1} parent=5 // pred_check_branch
        %145 = sbr.rel (%p142) target = $region12
      $region11: #{tpu_custom_call.1} parent=5 // pred_region
        %s146 = ssub.s32 %s12, 1
      $region12: #{tpu_custom_call.1} parent=5 // pred_fallthru
        _
      %p147 = scmp.lt.s32.totalorder %s12, 6
      // Predicated region
      $region13: #{tpu_custom_call.1} parent=5 // pred_check
        %p148 = pneg %p147
      $region14: #{tpu_custom_call.1} parent=5 // pred_check_branch
        %150 = sbr.rel (%p148) target = $region16
      $region15: #{tpu_custom_call.1} parent=5 // pred_region
        // Predicated region
        $region17: #{tpu_custom_call.1} parent=15 // pred_check
          %p151 = pneg %p46
        $region18: #{tpu_custom_call.1} parent=15 // pred_check_branch
          %153 = sbr.rel (%p151) target = $region20
        $region19: #{tpu_custom_call.1} parent=15 // pred_region
          %p154 = scmp.lt.s32.totalorder %s19, 1
          %s155 = scalar_select %p154, %s19, 1
          %p156 = scmp.lt.s32.totalorder %s20, 2
          %s157 = scalar_select %p156, %s20, 2
          %s158 = smul.addr %s155, 3
          %s159 = sadd.s32 %s157, %s158
          %s160 = smul.addr %s159, 8
          %s161 = scalar_lea.vmem %s0, %s160
        $region20: #{tpu_custom_call.1} parent=15 // pred_fallthru
          _
        // Predicated region
        $region21: #{tpu_custom_call.1} parent=15 // pred_check
          %p162 = pneg %p72
        $region22: #{tpu_custom_call.1} parent=15 // pred_check_branch
          %164 = sbr.rel (%p162) target = $region24
        $region23: #{tpu_custom_call.1} parent=15 // pred_region
          %p165 = scmp.lt.s32.totalorder %s20, 2
          %s166 = scalar_select %p165, %s20, 2
          %s167 = smul.addr %s166, 8
          %s168 = scalar_lea.vmem %s1, %s167
        $region24: #{tpu_custom_call.1} parent=15 // pred_fallthru
          _
        // Predicated region
        $region25: #{tpu_custom_call.1} parent=15 // pred_check
          %p169 = pneg %p98
        $region26: #{tpu_custom_call.1} parent=15 // pred_check_branch
          %171 = sbr.rel (%p169) target = $region28
        $region27: #{tpu_custom_call.1} parent=15 // pred_region
          %p172 = scmp.lt.s32.totalorder %s20, 2
          %s173 = scalar_select %p172, %s20, 2
          %s174 = smul.addr %s173, 8
          %s175 = scalar_lea.vmem %s2, %s174
        $region28: #{tpu_custom_call.1} parent=15 // pred_fallthru
          _
      $region16: #{tpu_custom_call.1} parent=5 // pred_fallthru
        _
      %p176 = scmp.le.s32.totalorder 1, %s12
      %p177 = scmp.lt.s32.totalorder %s12, 7
      %p178 = pnand %p176, %p177
      %p179 = pneg %p178
      // Predicated region
      $region29: #{tpu_custom_call.1} parent=5 // pred_check
        _
      $region30: #{tpu_custom_call.1} parent=5 // pred_check_branch
        %181 = sbr.rel (%p178) target = $region32
      $region31: #{tpu_custom_call.1} parent=5 // pred_region
        %s182 = ssub.s32 %s12, 1
        %p183 = scmp.lt.s32.totalorder %s21, 1
        %s184 = scalar_select %p183, %s21, 1
        %p185 = scmp.lt.s32.totalorder %s22, 2
        %s186 = scalar_select %p185, %s22, 2
        %s187 = smul.addr %s184, 3
        %s188 = sadd.s32 %s186, %s187
        %s189 = smul.addr %s188, 8
        %s190 = scalar_lea.vmem %s0, %s189
        %p191 = pneg %p52
        %p192 = pneg %p49
        %p193 = scmp.lt.s32.totalorder %s22, 2
        %s194 = scalar_select %p193, %s22, 2
        %s195 = smul.addr %s194, 8
        %s196 = scalar_lea.vmem %s1, %s195
        %p197 = pneg %p78
        %p198 = pneg %p75
        %p199 = scmp.lt.s32.totalorder %s22, 2
        %s200 = scalar_select %p199, %s22, 2
        %s201 = smul.addr %s200, 8
        %s202 = scalar_lea.vmem %s2, %s201
        %p203 = pneg %p104
        %p204 = pneg %p101
        %p205 = pneg %p132
        %p206 = pneg %p129
        %s207 = sand.u32 %s119, 1
        %s208 = scalar_lea.sflag [#allocation4], %s207
        %s209 = sand.u32 %s119, 1
        %s210 = smul.addr %s209, 8
        %s211 = scalar_lea.vmem [#allocation3], %s210
        %p212 = scmp.lt.s32.totalorder %s21, 1
        %s213 = scalar_select %p212, %s21, 1
        %p214 = scmp.lt.s32.totalorder %s22, 2
        %s215 = scalar_select %p214, %s22, 2
        %s216 = smul.addr %s213, 3
        %s217 = sadd.s32 %s215, %s216
        %s218 = smul.addr %s217, 8
        %s219 = scalar_lea.vmem %s0, %s218
        %p220 = scmp.lt.s32.totalorder %s22, 2
        %s221 = scalar_select %p220, %s22, 2
        %s222 = smul.addr %s221, 8
        %s223 = scalar_lea.vmem %s1, %s222
        %p224 = scmp.lt.s32.totalorder %s22, 2
        %s225 = scalar_select %p224, %s22, 2
        %s226 = smul.addr %s225, 8
        %s227 = scalar_lea.vmem %s2, %s226
        %228 = vst [vmem:[#allocation2] sm:$0xff] 0.0
        %vm229 = vcmask 97280
        %230 = vst.msk [vmem:[#allocation2 + $0x8] sm:$0xff] %vm229, 0.0
        %v231 = vld [vmem:[%s219] sm:$0xff]
        %233 = vrot.lane.b32.xlu0 %v231, 6
        %v234 = vpop.permute.xlu0 %233
        %vm236 = vcmask 1047600
        %237 = vst.msk [vmem:[#allocation2] sm:$0xff] %vm236, %v234
        %vm238 = vcmask 48128
        %239 = vst.msk [vmem:[#allocation2 + $0x8] sm:$0xff] %vm238, %v234
        %v240 = vld [vmem:[%s223] sm:$0xff]
        %v241 = vld [vmem:[%s227] sm:$0xff]
        %243 = vset.pattern.permute.xlu0 0
        %244 = vperm.xlu0 %243, %v241
        %v245 = vpop.permute.xlu0 %244
        %v247 = vld [vmem:[#allocation2] sm:$0xff]
        %249 = vset.pattern.permute.xlu0 0
        %250 = vperm.xlu0 %249, %v240
        %v251 = vpop.permute.xlu0 %250
        %v253 = vmul.f32 %v247, %v251
        %v254 = vadd.f32 %v245, %v253
        %v255 = vld [vmem:[#allocation2] sm:$0xff]
        %v256 = vld [vmem:[#allocation2 + $0x8] sm:$0xff]
        %257 = vset.pattern.permute.xlu0 1
        %258 = vperm.xlu0 %257, %v240
        %v259 = vpop.permute.xlu0 %258
        %v261 = vmul.f32 %v255, %v259
        %v262 = vmul.f32 %v256, %v259
        %265 = vrot.lane.b32.xlu0 %v261, 127
        %v266 = vpop.permute.xlu0 %265
        %267 = vrot.lane.b32.xlu0 %v262, 127
        %v268 = vpop.permute.xlu0 %267
        %vm269 = vcmask 1039360
        %v270 = vsel %vm269, %v266, %v268
        %v272 = vadd.f32 %v254, %v270
        %273 = vset.pattern.permute.xlu0 2
        %274 = vperm.xlu0 %273, %v240
        %v275 = vpop.permute.xlu0 %274
        %v277 = vmul.f32 %v255, %v275
        %v278 = vmul.f32 %v256, %v275
        %281 = vrot.lane.b32.xlu0 %v277, 126
        %v282 = vpop.permute.xlu0 %281
        %283 = vrot.lane.b32.xlu0 %v278, 126
        %v284 = vpop.permute.xlu0 %283
        %vm285 = vcmask 1031168
        %v286 = vsel %vm285, %v282, %v284
        %v288 = vadd.f32 %v272, %v286
        %289 = vset.pattern.permute.xlu0 3
        %290 = vperm.xlu0 %289, %v240
        %v291 = vpop.permute.xlu0 %290
        %v293 = vmul.f32 %v255, %v291
        %v294 = vmul.f32 %v256, %v291
        %297 = vrot.lane.b32.xlu0 %v293, 125
        %v298 = vpop.permute.xlu0 %297
        %299 = vrot.lane.b32.xlu0 %v294, 125
        %v300 = vpop.permute.xlu0 %299
        %vm301 = vcmask 1022976
        %v302 = vsel %vm301, %v298, %v300
        %v304 = vadd.f32 %v288, %v302
        %305 = vset.pattern.permute.xlu0 4
        %306 = vperm.xlu0 %305, %v240
        %v307 = vpop.permute.xlu0 %306
        %v309 = vmul.f32 %v255, %v307
        %v310 = vmul.f32 %v256, %v307
        %313 = vrot.lane.b32.xlu0 %v309, 124
        %v314 = vpop.permute.xlu0 %313
        %315 = vrot.lane.b32.xlu0 %v310, 124
        %v316 = vpop.permute.xlu0 %315
        %vm317 = vcmask 1014784
        %v318 = vsel %vm317, %v314, %v316
        %v320 = vadd.f32 %v304, %v318
        %321 = vset.pattern.permute.xlu0 5
        %322 = vperm.xlu0 %321, %v240
        %v323 = vpop.permute.xlu0 %322
        %v325 = vmul.f32 %v255, %v323
        %v326 = vmul.f32 %v256, %v323
        %329 = vrot.lane.b32.xlu0 %v325, 123
        %v330 = vpop.permute.xlu0 %329
        %331 = vrot.lane.b32.xlu0 %v326, 123
        %v332 = vpop.permute.xlu0 %331
        %vm333 = vcmask 1006592
        %v334 = vsel %vm333, %v330, %v332
        %v336 = vadd.f32 %v320, %v334
        %337 = vset.pattern.permute.xlu0 6
        %338 = vperm.xlu0 %337, %v240
        %v339 = vpop.permute.xlu0 %338
        %v341 = vmul.f32 %v255, %v339
        %v342 = vmul.f32 %v256, %v339
        %345 = vrot.lane.b32.xlu0 %v341, 122
        %v346 = vpop.permute.xlu0 %345
        %347 = vrot.lane.b32.xlu0 %v342, 122
        %v348 = vpop.permute.xlu0 %347
        %vm349 = vcmask 998400
        %v350 = vsel %vm349, %v346, %v348
        %v352 = vadd.f32 %v336, %v350
        %353 = vset.pattern.permute.xlu0 7
        %354 = vperm.xlu0 %353, %v240
        %v355 = vpop.permute.xlu0 %354
        %v357 = vmul.f32 %v255, %v355
        %v358 = vmul.f32 %v256, %v355
        %361 = vrot.lane.b32.xlu0 %v357, 121
        %v362 = vpop.permute.xlu0 %361
        %363 = vrot.lane.b32.xlu0 %v358, 121
        %v364 = vpop.permute.xlu0 %363
        %vm365 = vcmask 990208
        %v366 = vsel %vm365, %v362, %v364
        %v368 = vadd.f32 %v352, %v366
        %369 = vset.pattern.permute.xlu0 8
        %370 = vperm.xlu0 %369, %v240
        %v371 = vpop.permute.xlu0 %370
        %v373 = vmul.f32 %v255, %v371
        %v374 = vmul.f32 %v256, %v371
        %377 = vrot.lane.b32.xlu0 %v373, 120
        %v378 = vpop.permute.xlu0 %377
        %379 = vrot.lane.b32.xlu0 %v374, 120
        %v380 = vpop.permute.xlu0 %379
        %vm381 = vcmask 982016
        %v382 = vsel %vm381, %v378, %v380
        %v384 = vadd.f32 %v368, %v382
        %385 = vset.pattern.permute.xlu0 9
        %386 = vperm.xlu0 %385, %v240
        %v387 = vpop.permute.xlu0 %386
        %v389 = vmul.f32 %v255, %v387
        %v390 = vmul.f32 %v256, %v387
        %393 = vrot.lane.b32.xlu0 %v389, 119
        %v394 = vpop.permute.xlu0 %393
        %395 = vrot.lane.b32.xlu0 %v390, 119
        %v396 = vpop.permute.xlu0 %395
        %vm397 = vcmask 973824
        %v398 = vsel %vm397, %v394, %v396
        %v400 = vadd.f32 %v384, %v398
        %401 = vset.pattern.permute.xlu0 10
        %402 = vperm.xlu0 %401, %v240
        %v403 = vpop.permute.xlu0 %402
        %v405 = vmul.f32 %v255, %v403
        %v406 = vmul.f32 %v256, %v403
        %409 = vrot.lane.b32.xlu0 %v405, 118
        %v410 = vpop.permute.xlu0 %409
        %411 = vrot.lane.b32.xlu0 %v406, 118
        %v412 = vpop.permute.xlu0 %411
        %vm413 = vcmask 965632
        %v414 = vsel %vm413, %v410, %v412
        %v416 = vadd.f32 %v400, %v414
        %417 = vset.pattern.permute.xlu0 11
        %418 = vperm.xlu0 %417, %v240
        %v419 = vpop.permute.xlu0 %418
        %v421 = vmul.f32 %v255, %v419
        %v422 = vmul.f32 %v256, %v419
        %425 = vrot.lane.b32.xlu0 %v421, 117
        %v426 = vpop.permute.xlu0 %425
        %427 = vrot.lane.b32.xlu0 %v422, 117
        %v428 = vpop.permute.xlu0 %427
        %vm429 = vcmask 957440
        %v430 = vsel %vm429, %v426, %v428
        %v432 = vadd.f32 %v416, %v430
        %433 = vset.pattern.permute.xlu0 12
        %434 = vperm.xlu0 %433, %v240
        %v435 = vpop.permute.xlu0 %434
        %v437 = vmul.f32 %v255, %v435
        %v438 = vmul.f32 %v256, %v435
        %441 = vrot.lane.b32.xlu0 %v437, 116
        %v442 = vpop.permute.xlu0 %441
        %443 = vrot.lane.b32.xlu0 %v438, 116
        %v444 = vpop.permute.xlu0 %443
        %vm445 = vcmask 949248
        %v446 = vsel %vm445, %v442, %v444
        %v448 = vadd.f32 %v432, %v446
        %449 = vst [vmem:[%s211] sm:$0xff] %v448
        %s450 = sand.u32 %s119, 1
        %s451 = scalar_lea.sflag [#allocation4], %s450
        %s452 = sand.u32 %s119, 1
        %s453 = smul.addr %s452, 8
        %s454 = scalar_lea.vmem [#allocation3], %s453
        // Predicated region
        $region33: #{tpu_custom_call.1} parent=31 // pred_check
          %p455 = pneg %p129
        $region34: #{tpu_custom_call.1} parent=31 // pred_check_branch
          %457 = sbr.rel (%p455) target = $region36
        $region35: #{tpu_custom_call.1} parent=31 // pred_region
          %459 = vsyncadd %s451, 0
          %s460 = smul.addr %s21, 3
          %s461 = sadd.s32 %s22, %s460
          %s462 = smul.addr %s461, 8
          %s463 = scalar_lea.hbm %s3, %s462
          %s465 = sshll.u32 %s454, 4
          %s466 = int_to_ptr.vmem [resolvable:$true] %s465
          %s467 = sshll.u32 %s463, 4
          %s468 = int_to_ptr.hbm [resolvable:$true] %s467
          %470 = dma.vmem_to_hbm [thread:$0]  %s466, 128, %s468, %s451
        $region36: #{tpu_custom_call.1} parent=31 // pred_fallthru
          _
      $region32: #{tpu_custom_call.1} parent=5 // pred_fallthru
        _
      %p471 = scmp.le.s32.totalorder 2, %s12
      // Predicated region
      $region37: #{tpu_custom_call.1} parent=5 // pred_check
        %p472 = pneg %p471
      $region38: #{tpu_custom_call.1} parent=5 // pred_check_branch
        %474 = sbr.rel (%p472) target = $region40
      $region39: #{tpu_custom_call.1} parent=5 // pred_region
        %s475 = ssub.s32 %s12, 2
        // Predicated region
        $region41: #{tpu_custom_call.1} parent=39 // pred_check
          %p476 = pneg %p135
        $region42: #{tpu_custom_call.1} parent=39 // pred_check_branch
          %478 = sbr.rel (%p476) target = $region44
        $region43: #{tpu_custom_call.1} parent=39 // pred_region
          %s479 = sand.u32 %s120, 1
          %s480 = scalar_lea.sflag [#allocation4], %s479
          %s481 = sand.u32 %s120, 1
          %s482 = smul.addr %s481, 8
          %s483 = scalar_lea.vmem [#allocation3], %s482
          %485 = dma.done %s480, 128
        $region44: #{tpu_custom_call.1} parent=39 // pred_fallthru
          _
      $region40: #{tpu_custom_call.1} parent=5 // pred_fallthru
        _
    $region6: #{tpu_custom_call.1} parent=1 // loop_footer
      %s16 = sadd.s32 1, %s12
    $region7: #{tpu_custom_call.1} parent=1 // loop_footer_branch
      %11 = sbr.rel target = $region3
    $region8: #{tpu_custom_call.1} parent=1 // loop_exit
      _
    %486 = vsyncpa [#allocation4], 1
    %s487 = scalar_lea.sflag [#allocation4], 1
    %488 = vsyncpa %s487, 1

</llo_original>
